<compile_context>
chip_gen: v6e
topology: v6e:2x2x1
jax: 0.10.0
libtpu: 0.0.40
codegen_flags: <defaults>
</compile_context>

<pallas_src>
import functools

import jax
import jax.numpy as jnp
import numpy as np
from jax.experimental import pallas as pl
from jax.experimental.pallas import tpu as pltpu


# ----------------------------------------------------------------------------- helpers
def _round_up(x, m):
    return ((x + m - 1) // m) * m


def _vmem_capacity_bytes():
    """Physical VMEM of the current chip; conservative 64 MiB fallback (v7x)."""
    try:
        info = pltpu.get_tpu_info()
        cap = getattr(info, "vmem_capacity_bytes", None)
        if cap:
            return int(cap)
    except Exception:
        pass
    return 64 * 1024 * 1024


def _vmem_tile_bytes(shape, itemsize, sublane=8):
    """Rough VMEM footprint of a tile, including (sublane, 128) lane padding."""
    s = list(shape)
    s[-1] = _round_up(s[-1], 128)
    if len(s) >= 2:
        s[-2] = _round_up(s[-2], sublane)
    return int(np.prod(s)) * itemsize


# ----------------------------------------------------------------------------- kernel
def detector_kernel(bert_ref, lp_ref,
                    pool_w_ref, pool_b_ref,
                    prob_w_ref, prob_b_ref,
                    out_ref,
                    m_sc, l_sc, acc_sc,
                    *, seq_chunk, s_valid):
    """One (batch_block, seq_chunk) step of the fused head.

    Online softmax over the sequence axis, all intermediates in [Bblk, Sc, *]
    layout (Sc on sublanes — no relayout between the H-reduce and the pooling).
      logits = <bert, pool_w> + pool_b          (VPU mul + cross-lane reduce)
      attn   = softmax_seq(logits)              (streamed m/l accumulators)
      pooled = sum_s attn * SiLU(lp*prob_w+b)   (sublane reduce into acc)
    """
    k = pl.program_id(1)

    @pl.when(k == 0)
    def _init():
        m_sc[...] = jnp.full_like(m_sc, -jnp.inf)
        l_sc[...] = jnp.zeros_like(l_sc)
        acc_sc[...] = jnp.zeros_like(acc_sc)

    bert = bert_ref[...].astype(jnp.float32)        # bf16 stream -> f32 in VMEM
    lp = lp_ref[...]                                 # [Bblk, Sc, 1] f32

    # ---- pool logits, kept in [Bblk, Sc, 1] (Sc on sublanes) ----
    logits = (jnp.sum(bert * pool_w_ref[...], axis=-1, keepdims=True)
              + pool_b_ref[...])                     # [Bblk, Sc, 1]

    if s_valid is not None:                          # static: mask padded tail
        pos = jax.lax.broadcasted_iota(jnp.int32, logits.shape, 1) + k * seq_chunk
        logits = jnp.where(pos < s_valid, logits, -jnp.inf)

    # ---- online softmax update (sublane max/sum) ----
    m_prev = m_sc[...]                               # [Bblk, 1, 1]
    m_new = jnp.maximum(m_prev, jnp.max(logits, axis=1, keepdims=True))
    scale = jnp.exp(m_prev - m_new)                  # [Bblk, 1, 1]
    p = jnp.exp(logits - m_new)                      # [Bblk, Sc, 1] (0 on pad)

    # ---- prob_proj: Linear(1 -> P) + SiLU ----
    z = lp * prob_w_ref[...] + prob_b_ref[...]       # [Bblk, Sc, P]
    prob_proj = z * jax.nn.sigmoid(z)

    # ---- accumulate un-normalized pooled value ----
    l_sc[...] = l_sc[...] * scale + jnp.sum(p, axis=1, keepdims=True)
    acc_sc[...] = acc_sc[...] * scale + jnp.sum(p * prob_proj, axis=1, keepdims=True)
    m_sc[...] = m_new

    @pl.when(k == pl.num_programs(1) - 1)
    def _finalize():
        # Tiny (Bblk x P) exact divide once per batch block; lane-dense store.
        out_ref[...] = acc_sc[...] / l_sc[...]       # [Bblk, 1, P]


# ----------------------------------------------------------------------------- tiling
def _choose_tiles(B, S, H, *, vmem_cap, bert_itemsize=2, sublane=16):
    """Pick (b_block, seq_chunk).  Bigger streamed blocks on 128 MiB parts
    (v5e/v6e), conservative 4 MiB blocks on 64 MiB parts (v7x).  seq_chunk is
    always a multiple of 16 (bf16 sublane packing); ragged S is handled by
    padding + in-kernel masking, never by a full-S fallback."""
    target_block_bytes = (8 << 20) if vmem_cap >= (96 << 20) else (4 << 20)
    rows_budget = max(sublane, target_block_bytes // (H * bert_itemsize))
    rows_budget = (rows_budget // sublane) * sublane

    s_pad_min = _round_up(S, sublane)
    if s_pad_min <= rows_budget:
        seq_chunk = s_pad_min
        # keep the "parallel" batch axis at extent >= 2 when B >= 2 (v7x 2 TCs)
        bb_cap = max(1, (B + 1) // 2)
        bb = max(1, min(bb_cap, rows_budget // seq_chunk))
        while bb > 1 and B % bb:
            bb -= 1
        b_block = bb
    else:
        b_block = 1
        seq_chunk = rows_budget
    return b_block, seq_chunk


# ----------------------------------------------------------------------------- wrapper
def hallucination_head(bert_hidden, token_logprobs, params, *,
                       b_block=None, seq_chunk=None):
    """Streaming Pallas head.

    bert_hidden: [B, S, H] (bf16 preferred — streamed as-is; f32 is downcast
    once).  token_logprobs: [B, S].  Returns [B] f32 logits.
    """
    B, S, H = bert_hidden.shape
    P = params["prob_w"].shape[1]

    # Stream the dominant operand in bf16 (no-op if the encoder already emits bf16).
    if bert_hidden.dtype != jnp.bfloat16:
        bert_hidden = bert_hidden.astype(jnp.bfloat16)
    lp = token_logprobs.astype(jnp.float32)

    vmem_cap = _vmem_capacity_bytes()
    auto_b, auto_s = _choose_tiles(B, S, H, vmem_cap=vmem_cap)
    if b_block is None:
        b_block = auto_b
    if seq_chunk is None:
        seq_chunk = auto_s
    assert B % b_block == 0
    assert seq_chunk % 16 == 0, "bf16 bert block needs seq_chunk % 16 == 0"

    # Pad S up to a multiple of seq_chunk; padded tail is masked in-kernel.
    S_pad = _round_up(S, seq_chunk)
    if S_pad != S:
        bert_hidden = jnp.pad(bert_hidden, ((0, 0), (0, S_pad - S), (0, 0)))
        lp = jnp.pad(lp, ((0, 0), (0, S_pad - S)))
    lp3d = lp.reshape(B, S_pad, 1)
    s_valid = S if S_pad != S else None

    grid = (B // b_block, S_pad // seq_chunk)
    const_idx = lambda b, k: (0, 0)

    in_specs = [
        pl.BlockSpec((b_block, seq_chunk, H), lambda b, k: (b, k, 0)),   # bert (bf16)
        pl.BlockSpec((b_block, seq_chunk, 1), lambda b, k: (b, k, 0)),   # logprobs
        pl.BlockSpec(params["pool_w"].shape, const_idx),                 # resident
        pl.BlockSpec(params["pool_b"].shape, const_idx),
        pl.BlockSpec(params["prob_w"].shape, const_idx),
        pl.BlockSpec(params["prob_b"].shape, const_idx),
    ]
    out_specs = pl.BlockSpec((b_block, 1, P), lambda b, k: (b, 0, 0))

    scratch_shapes = [
        pltpu.VMEM((b_block, 1, 1), jnp.float32),   # running max m
        pltpu.VMEM((b_block, 1, 1), jnp.float32),   # running denom l
        pltpu.VMEM((b_block, 1, P), jnp.float32),   # running weighted sum
    ]

    # ---- VMEM budgeting (double-buffered streamed blocks + resident weights) ----
    bert_blk = _vmem_tile_bytes((b_block, seq_chunk, H), 2, sublane=16)
    lp_blk = _vmem_tile_bytes((b_block, seq_chunk, 1), 4)   # lanes pad to 128 (counted)
    out_blk = _vmem_tile_bytes((b_block, 1, P), 4)
    weight_bytes = sum(_vmem_tile_bytes(params[k].shape, 4)
                       for k in ("pool_w", "pool_b", "prob_w", "prob_b"))
    scratch_bytes = 2 * _vmem_tile_bytes((b_block, 1, 1), 4) + _vmem_tile_bytes((b_block, 1, P), 4)
    vmem_est = 2 * (bert_blk + lp_blk) + 2 * out_blk + 2 * weight_bytes + scratch_bytes
    headroom = (16 << 20) if vmem_cap >= (96 << 20) else (8 << 20)
    vmem_limit = int(min(max(4 * vmem_est, 32 << 20), vmem_cap - headroom))

    raw_weight_bytes = sum(int(np.prod(params[k].shape)) * 4
                           for k in ("pool_w", "pool_b", "prob_w", "prob_b"))
    cost = pl.CostEstimate(
        flops=int(2 * B * S_pad * H + 8 * B * S_pad * P),
        transcendentals=int(B * S_pad * (P + 1)),
        bytes_accessed=int(2 * B * S_pad * H + 4 * B * S_pad + 4 * B * P
                           + raw_weight_bytes),
    )

    kernel = functools.partial(detector_kernel, seq_chunk=seq_chunk, s_valid=s_valid)

    pooled = pl.pallas_call(
        kernel,
        out_shape=jax.ShapeDtypeStruct((B, 1, P), jnp.float32),
        grid_spec=pltpu.PrefetchScalarGridSpec(
            num_scalar_prefetch=0,
            grid=grid,
            in_specs=in_specs,
            out_specs=out_specs,
            scratch_shapes=scratch_shapes,
        ),
        compiler_params=pltpu.CompilerParams(
            dimension_semantics=("parallel", "arbitrary"),
            vmem_limit_bytes=vmem_limit,
        ),
        cost_estimate=cost,
    )(bert_hidden, lp3d,
      params["pool_w"], params["pool_b"],
      params["prob_w"], params["prob_b"])

    pooled = pooled.reshape(B, P)
    # cls2 MLP on the tiny [B, P] pooled slab in plain JAX (negligible MXU work;
    # keeps 4 weight operands out of the kernel).  Dropout = identity (eval).
    h = jnp.maximum(pooled @ params["w1"] + params["b1"][0], 0.0)
    out = h @ params["w2"] + params["b2"][0]
    return out[:, 0]


# ----------------------------------------------------------------------------- params / reference
def init_params(key, bert_dim=768, prob_embed_size=128, hidden_size=256):
    ks = jax.random.split(key, 8)
    s = 0.02
    return {
        # pool: Linear(768 -> 1), weight stored row-form [1, H]
        "pool_w": (jax.random.normal(ks[0], (1, bert_dim)) * s).astype(jnp.float32),
        "pool_b": jnp.zeros((1, 1), jnp.float32),
        # prob_proj: Linear(1 -> 128)
        "prob_w": (jax.random.normal(ks[1], (1, prob_embed_size)) * s).astype(jnp.float32),
        "prob_b": (jax.random.normal(ks[2], (1, prob_embed_size)) * s).astype(jnp.float32),
        # cls2: Linear(128 -> 256), Linear(256 -> 1)   (stored [in, out])
        "w1": (jax.random.normal(ks[3], (prob_embed_size, hidden_size)) * s).astype(jnp.float32),
        "b1": (jax.random.normal(ks[4], (1, hidden_size)) * s).astype(jnp.float32),
        "w2": (jax.random.normal(ks[5], (hidden_size, 1)) * s).astype(jnp.float32),
        "b2": jnp.zeros((1, 1), jnp.float32),
    }


def reference_head(bert_hidden, token_logprobs, p):
    """Pure-JAX reference mirroring the PyTorch forward (eval mode)."""
    x = bert_hidden.astype(jnp.float32)
    logits = jnp.sum(x * p["pool_w"][0], axis=-1, keepdims=True) + p["pool_b"][0]
    attn = jax.nn.softmax(logits, axis=1)                           # softmax over seq
    z = token_logprobs[..., None] * p["prob_w"][0] + p["prob_b"][0]
    prob_proj = z * jax.nn.sigmoid(z)                               # SiLU
    pooled = jnp.sum(attn * prob_proj, axis=1)                      # [B, P]
    h = jnp.maximum(pooled @ p["w1"] + p["b1"][0], 0.0)
    return (h @ p["w2"] + p["b2"][0])[:, 0]


# ----------------------------------------------------------------------------- main
if __name__ == "__main__":
    BERT_DIM, PROB_EMBED, HIDDEN = 768, 128, 256

    key = jax.random.PRNGKey(0)
    k_bert, k_lp, k_params, k_bert2, k_lp2 = jax.random.split(key, 5)
    params = init_params(k_params, BERT_DIM, PROB_EMBED, HIDDEN)

    # Case 1: S multiple of 16, auto tiling.  bert_hidden arrives in bf16
    # (stand-in for bert(input_ids, attention_mask).last_hidden_state).
    B, S = 2, 32
    bert_hidden = jax.random.normal(k_bert, (B, S, BERT_DIM), jnp.float32).astype(jnp.bfloat16)
    token_logprobs = -jnp.abs(jax.random.normal(k_lp, (B, S), jnp.float32))
    ref = reference_head(bert_hidden, token_logprobs, params)

    out_auto = jax.block_until_ready(
        hallucination_head(bert_hidden, token_logprobs, params))
    np.testing.assert_allclose(np.asarray(out_auto), np.asarray(ref),
                               rtol=2e-4, atol=2e-5)

    # Case 2: explicit tiling — 2 batch blocks x 2 sequence chunks exercises the
    # streamed online-softmax accumulation path used at realistic B*S.
    out_tiled = jax.block_until_ready(
        hallucination_head(bert_hidden, token_logprobs, params,
                           b_block=1, seq_chunk=16))
    np.testing.assert_allclose(np.asarray(out_tiled), np.asarray(ref),
                               rtol=2e-4, atol=2e-5)

    # Case 3: ragged S (40 -> padded to 48) exercises the masked-tail path that
    # replaced the old full-S fallback.
    S2 = 40
    bert2 = jax.random.normal(k_bert2, (B, S2, BERT_DIM), jnp.float32).astype(jnp.bfloat16)
    lp2 = -jnp.abs(jax.random.normal(k_lp2, (B, S2), jnp.float32))
    ref2 = reference_head(bert2, lp2, params)
    out_pad = jax.block_until_ready(
        hallucination_head(bert2, lp2, params, b_block=1, seq_chunk=16))
    np.testing.assert_allclose(np.asarray(out_pad), np.asarray(ref2),
                               rtol=2e-4, atol=2e-5)

    print("KERNEL_OK")
</pallas_src>

<mosaic_0001>
module attributes {stable_mosaic.version = 11 : i64} {
  func.func @detector_kernel(%arg0: i32, %arg1: i32, %arg2: memref<1x32x768xbf16, #tpu.memory_space<vmem>>, %arg3: memref<1x32x1xf32, #tpu.memory_space<vmem>>, %arg4: memref<1x768xf32, #tpu.memory_space<vmem>>, %arg5: memref<1x1xf32, #tpu.memory_space<vmem>>, %arg6: memref<1x128xf32, #tpu.memory_space<vmem>>, %arg7: memref<1x128xf32, #tpu.memory_space<vmem>>, %arg8: memref<1x1x128xf32, #tpu.memory_space<vmem>>, %arg9: memref<1x1x1xf32, #tpu.memory_space<vmem>>, %arg10: memref<1x1x1xf32, #tpu.memory_space<vmem>>, %arg11: memref<1x1x128xf32, #tpu.memory_space<vmem>>) attributes {dimension_semantics = [#tpu.dimension_semantics<parallel>, #tpu.dimension_semantics<arbitrary>], iteration_bounds = array<i64: 2, 1>, scalar_prefetch = 0 : i64, scratch_operands = 3 : i64, tpu.core_type = #tpu.core_type<tc>, window_params = [{transform_indices = @transform_0, window_bounds = array<i64: 1, 32, 768>}, {transform_indices = @transform_1, window_bounds = array<i64: 1, 32, 1>}, {pipeline_mode = #tpu.pipeline_mode<synchronous>, transform_indices = @transform_2, window_bounds = array<i64: 1, 768>}, {pipeline_mode = #tpu.pipeline_mode<synchronous>, transform_indices = @transform_3, window_bounds = array<i64: 1, 1>}, {pipeline_mode = #tpu.pipeline_mode<synchronous>, transform_indices = @transform_4, window_bounds = array<i64: 1, 128>}, {pipeline_mode = #tpu.pipeline_mode<synchronous>, transform_indices = @transform_5, window_bounds = array<i64: 1, 128>}, {transform_indices = @transform_6, window_bounds = array<i64: 1, 1, 128>}]} {
    %c0_i32 = arith.constant 0 : i32
    %0 = arith.cmpi eq, %arg1, %c0_i32 : i32
    %1 = arith.extui %0 : i1 to i32
    %c0_i32_0 = arith.constant 0 : i32
    %2 = arith.cmpi ne, %1, %c0_i32_0 : i32
    scf.if %2 {
      %cst_38 = arith.constant 0xFF800000 : f32
      %59 = vector.broadcast %cst_38 : f32 to vector<1x1x1xf32>
      %c0_39 = arith.constant 0 : index
      %c0_40 = arith.constant 0 : index
      %c0_41 = arith.constant 0 : index
      %60 = vector.load %arg9[%c0_39, %c0_40, %c0_41] : memref<1x1x1xf32, #tpu.memory_space<vmem>>, vector<1x1x1xf32>
      tpu.vector_store %arg9[%c0_39, %c0_40, %c0_41], %59 {strides = array<i32>} : memref<1x1x1xf32, #tpu.memory_space<vmem>>, vector<1x1x1xf32>,
      %cst_42 = arith.constant 0.000000e+00 : f32
      %61 = vector.broadcast %cst_42 : f32 to vector<1x1x1xf32>
      %c0_43 = arith.constant 0 : index
      %c0_44 = arith.constant 0 : index
      %c0_45 = arith.constant 0 : index
      %62 = vector.load %arg10[%c0_43, %c0_44, %c0_45] : memref<1x1x1xf32, #tpu.memory_space<vmem>>, vector<1x1x1xf32>
      tpu.vector_store %arg10[%c0_43, %c0_44, %c0_45], %61 {strides = array<i32>} : memref<1x1x1xf32, #tpu.memory_space<vmem>>, vector<1x1x1xf32>,
      %cst_46 = arith.constant 0.000000e+00 : f32
      %63 = vector.broadcast %cst_46 : f32 to vector<1x1x128xf32>
      %c0_47 = arith.constant 0 : index
      %c0_48 = arith.constant 0 : index
      %c0_49 = arith.constant 0 : index
      %64 = vector.load %arg11[%c0_47, %c0_48, %c0_49] : memref<1x1x128xf32, #tpu.memory_space<vmem>>, vector<1x1x128xf32>
      tpu.vector_store %arg11[%c0_47, %c0_48, %c0_49], %63 {strides = array<i32>} : memref<1x1x128xf32, #tpu.memory_space<vmem>>, vector<1x1x128xf32>,
    } else {
    }
    %c0 = arith.constant 0 : index
    %c0_1 = arith.constant 0 : index
    %c0_2 = arith.constant 0 : index
    %3 = vector.load %arg2[%c0, %c0_1, %c0_2] : memref<1x32x768xbf16, #tpu.memory_space<vmem>>, vector<1x32x768xbf16>
    %4 = arith.extf %3 : vector<1x32x768xbf16> to vector<1x32x768xf32>
    %c0_3 = arith.constant 0 : index
    %c0_4 = arith.constant 0 : index
    %c0_5 = arith.constant 0 : index
    %5 = vector.load %arg3[%c0_3, %c0_4, %c0_5] : memref<1x32x1xf32, #tpu.memory_space<vmem>>, vector<1x32x1xf32>
    %c0_6 = arith.constant 0 : index
    %c0_7 = arith.constant 0 : index
    %6 = vector.load %arg4[%c0_6, %c0_7] : memref<1x768xf32, #tpu.memory_space<vmem>>, vector<1x768xf32>
    %7 = vector.shape_cast %6 : vector<1x768xf32> to vector<1x1x768xf32>
    %8 = vector.broadcast %7 : vector<1x1x768xf32> to vector<1x32x768xf32>
    %9 = arith.mulf %4, %8 : vector<1x32x768xf32>
    %cst = arith.constant dense<0.000000e+00> : vector<1x32xf32>
    %10 = vector.multi_reduction <add>, %9, %cst [2] : vector<1x32x768xf32> to vector<1x32xf32>
    %11 = vector.shape_cast %10 : vector<1x32xf32> to vector<1x32x1xf32>
    %c0_8 = arith.constant 0 : index
    %c0_9 = arith.constant 0 : index
    %12 = vector.load %arg5[%c0_8, %c0_9] : memref<1x1xf32, #tpu.memory_space<vmem>>, vector<1x1xf32>
    %13 = vector.shape_cast %12 : vector<1x1xf32> to vector<1x1x1xf32>
    %14 = vector.broadcast %13 : vector<1x1x1xf32> to vector<1x32x1xf32>
    %15 = arith.addf %11, %14 : vector<1x32x1xf32>
    %c0_10 = arith.constant 0 : index
    %c0_11 = arith.constant 0 : index
    %c0_12 = arith.constant 0 : index
    %16 = vector.load %arg9[%c0_10, %c0_11, %c0_12] : memref<1x1x1xf32, #tpu.memory_space<vmem>>, vector<1x1x1xf32>
    %cst_13 = arith.constant dense<0xFF800000> : vector<1x1xf32>
    %17 = vector.multi_reduction <maximumf>, %15, %cst_13 [1] : vector<1x32x1xf32> to vector<1x1xf32>
    %18 = vector.shape_cast %17 : vector<1x1xf32> to vector<1x1x1xf32>
    %19 = arith.maximumf %16, %18 : vector<1x1x1xf32>
    %20 = arith.subf %16, %19 : vector<1x1x1xf32>
    %21 = math.exp %20 : vector<1x1x1xf32>
    %22 = vector.broadcast %19 : vector<1x1x1xf32> to vector<1x32x1xf32>
    %23 = arith.subf %15, %22 : vector<1x32x1xf32>
    %24 = math.exp %23 : vector<1x32x1xf32>
    %c0_14 = arith.constant 0 : index
    %c0_15 = arith.constant 0 : index
    %25 = vector.load %arg6[%c0_14, %c0_15] : memref<1x128xf32, #tpu.memory_space<vmem>>, vector<1x128xf32>
    %26 = vector.shape_cast %25 : vector<1x128xf32> to vector<1x1x128xf32>
    %27 = vector.broadcast %5 : vector<1x32x1xf32> to vector<1x32x128xf32>
    %28 = vector.broadcast %26 : vector<1x1x128xf32> to vector<1x32x128xf32>
    %29 = arith.mulf %27, %28 : vector<1x32x128xf32>
    %c0_16 = arith.constant 0 : index
    %c0_17 = arith.constant 0 : index
    %30 = vector.load %arg7[%c0_16, %c0_17] : memref<1x128xf32, #tpu.memory_space<vmem>>, vector<1x128xf32>
    %31 = vector.shape_cast %30 : vector<1x128xf32> to vector<1x1x128xf32>
    %32 = vector.broadcast %31 : vector<1x1x128xf32> to vector<1x32x128xf32>
    %33 = arith.addf %29, %32 : vector<1x32x128xf32>
    %34 = arith.negf %33 : vector<1x32x128xf32>
    %35 = math.exp %34 : vector<1x32x128xf32>
    %cst_18 = arith.constant 1.000000e+00 : f32
    %36 = vector.broadcast %cst_18 : f32 to vector<1x32x128xf32>
    %37 = arith.addf %36, %35 : vector<1x32x128xf32>
    %38 = arith.divf %36, %37 : vector<1x32x128xf32>
    %39 = arith.mulf %33, %38 : vector<1x32x128xf32>
    %c0_19 = arith.constant 0 : index
    %c0_20 = arith.constant 0 : index
    %c0_21 = arith.constant 0 : index
    %40 = vector.load %arg10[%c0_19, %c0_20, %c0_21] : memref<1x1x1xf32, #tpu.memory_space<vmem>>, vector<1x1x1xf32>
    %41 = arith.mulf %40, %21 : vector<1x1x1xf32>
    %cst_22 = arith.constant dense<0.000000e+00> : vector<1x1xf32>
    %42 = vector.multi_reduction <add>, %24, %cst_22 [1] : vector<1x32x1xf32> to vector<1x1xf32>
    %43 = vector.shape_cast %42 : vector<1x1xf32> to vector<1x1x1xf32>
    %44 = arith.addf %41, %43 : vector<1x1x1xf32>
    %c0_23 = arith.constant 0 : index
    %c0_24 = arith.constant 0 : index
    %c0_25 = arith.constant 0 : index
    %45 = vector.load %arg10[%c0_23, %c0_24, %c0_25] : memref<1x1x1xf32, #tpu.memory_space<vmem>>, vector<1x1x1xf32>
    tpu.vector_store %arg10[%c0_23, %c0_24, %c0_25], %44 {strides = array<i32>} : memref<1x1x1xf32, #tpu.memory_space<vmem>>, vector<1x1x1xf32>,
    %c0_26 = arith.constant 0 : index
    %c0_27 = arith.constant 0 : index
    %c0_28 = arith.constant 0 : index
    %46 = vector.load %arg11[%c0_26, %c0_27, %c0_28] : memref<1x1x128xf32, #tpu.memory_space<vmem>>, vector<1x1x128xf32>
    %47 = vector.broadcast %21 : vector<1x1x1xf32> to vector<1x1x128xf32>
    %48 = arith.mulf %46, %47 : vector<1x1x128xf32>
    %49 = vector.broadcast %24 : vector<1x32x1xf32> to vector<1x32x128xf32>
    %50 = arith.mulf %49, %39 : vector<1x32x128xf32>
    %cst_29 = arith.constant dense<0.000000e+00> : vector<1x128xf32>
    %51 = vector.multi_reduction <add>, %50, %cst_29 [1] : vector<1x32x128xf32> to vector<1x128xf32>
    %52 = vector.shape_cast %51 : vector<1x128xf32> to vector<1x1x128xf32>
    %53 = arith.addf %48, %52 : vector<1x1x128xf32>
    %c0_30 = arith.constant 0 : index
    %c0_31 = arith.constant 0 : index
    %c0_32 = arith.constant 0 : index
    %54 = vector.load %arg11[%c0_30, %c0_31, %c0_32] : memref<1x1x128xf32, #tpu.memory_space<vmem>>, vector<1x1x128xf32>
    tpu.vector_store %arg11[%c0_30, %c0_31, %c0_32], %53 {strides = array<i32>} : memref<1x1x128xf32, #tpu.memory_space<vmem>>, vector<1x1x128xf32>,
    %c0_33 = arith.constant 0 : index
    %c0_34 = arith.constant 0 : index
    %c0_35 = arith.constant 0 : index
    %55 = vector.load %arg9[%c0_33, %c0_34, %c0_35] : memref<1x1x1xf32, #tpu.memory_space<vmem>>, vector<1x1x1xf32>
    tpu.vector_store %arg9[%c0_33, %c0_34, %c0_35], %19 {strides = array<i32>} : memref<1x1x1xf32, #tpu.memory_space<vmem>>, vector<1x1x1xf32>,
    %c0_i32_36 = arith.constant 0 : i32
    %56 = arith.cmpi eq, %arg1, %c0_i32_36 : i32
    %57 = arith.extui %56 : i1 to i32
    %c0_i32_37 = arith.constant 0 : i32
    %58 = arith.cmpi ne, %57, %c0_i32_37 : i32
    scf.if %58 {
      %c0_38 = arith.constant 0 : index
      %c0_39 = arith.constant 0 : index
      %c0_40 = arith.constant 0 : index
      %59 = vector.load %arg11[%c0_38, %c0_39, %c0_40] : memref<1x1x128xf32, #tpu.memory_space<vmem>>, vector<1x1x128xf32>
      %c0_41 = arith.constant 0 : index
      %c0_42 = arith.constant 0 : index
      %c0_43 = arith.constant 0 : index
      %60 = vector.load %arg10[%c0_41, %c0_42, %c0_43] : memref<1x1x1xf32, #tpu.memory_space<vmem>>, vector<1x1x1xf32>
      %61 = vector.broadcast %60 : vector<1x1x1xf32> to vector<1x1x128xf32>
      %62 = arith.divf %59, %61 : vector<1x1x128xf32>
      %c0_44 = arith.constant 0 : index
      %c0_45 = arith.constant 0 : index
      %c0_46 = arith.constant 0 : index
      %63 = vector.load %arg8[%c0_44, %c0_45, %c0_46] : memref<1x1x128xf32, #tpu.memory_space<vmem>>, vector<1x1x128xf32>
      tpu.vector_store %arg8[%c0_44, %c0_45, %c0_46], %62 {strides = array<i32>} : memref<1x1x128xf32, #tpu.memory_space<vmem>>, vector<1x1x128xf32>,
    } else {
    }
    return
  }
  func.func @transform_0(%arg0: i32, %arg1: i32) -> (i32, i32, i32) {
    %c0_i32 = arith.constant 0 : i32
    %c0_i32_0 = arith.constant 0 : i32
    return %arg0, %arg1, %c0_i32 : i32, i32, i32
  }
  func.func @transform_1(%arg0: i32, %arg1: i32) -> (i32, i32, i32) {
    %c0_i32 = arith.constant 0 : i32
    %c0_i32_0 = arith.constant 0 : i32
    return %arg0, %arg1, %c0_i32 : i32, i32, i32
  }
  func.func @transform_2(%arg0: i32, %arg1: i32) -> (i32, i32) {
    %c0_i32 = arith.constant 0 : i32
    %c0_i32_0 = arith.constant 0 : i32
    %c0_i32_1 = arith.constant 0 : i32
    return %c0_i32, %c0_i32_0 : i32, i32
  }
  func.func @transform_3(%arg0: i32, %arg1: i32) -> (i32, i32) {
    %c0_i32 = arith.constant 0 : i32
    %c0_i32_0 = arith.constant 0 : i32
    %c0_i32_1 = arith.constant 0 : i32
    return %c0_i32, %c0_i32_0 : i32, i32
  }
  func.func @transform_4(%arg0: i32, %arg1: i32) -> (i32, i32) {
    %c0_i32 = arith.constant 0 : i32
    %c0_i32_0 = arith.constant 0 : i32
    %c0_i32_1 = arith.constant 0 : i32
    return %c0_i32, %c0_i32_0 : i32, i32
  }
  func.func @transform_5(%arg0: i32, %arg1: i32) -> (i32, i32) {
    %c0_i32 = arith.constant 0 : i32
    %c0_i32_0 = arith.constant 0 : i32
    %c0_i32_1 = arith.constant 0 : i32
    return %c0_i32, %c0_i32_0 : i32, i32
  }
  func.func @transform_6(%arg0: i32, %arg1: i32) -> (i32, i32, i32) {
    %c0_i32 = arith.constant 0 : i32
    %c0_i32_0 = arith.constant 0 : i32
    %c0_i32_1 = arith.constant 0 : i32
    return %arg0, %c0_i32, %c0_i32_0 : i32, i32, i32
  }
}

</mosaic_0001>

<llo_original>
// kernel: tpu_custom_call.1
$region0: #{tpu_custom_call.1}
  #allocation0 [shape = 'u32[]', space=smem, size = 0x4, offset = 0x4, fixed_abs, tag = 'smem constant byte address 0x4 - core index']
  #allocation1 [shape = 'u32[144,128]{1,0:T(1,128)}', space=vmem, size = 0x12000, scoped, tag = 'internal scratch']
  #allocation2 [shape = 'f32[1,1,1]{2,1,0:T(1,128)}', space=vmem, size = 0x200, scoped, tag = 'scratch operand']
  #allocation3 [shape = 'f32[1,1,1]{2,1,0:T(1,128)}', space=vmem, size = 0x200, scoped, tag = 'scratch operand']
  #allocation4 [shape = 'f32[1,1,128]{2,1,0:T(1,128)}', space=vmem, size = 0x200, scoped, tag = 'scratch operand']
  #allocation5 [shape = 'f32[1,1]{1,0:T(1,128)S(1)}', space=vmem, size = 0x200, scoped, tag = 'scoped memory for tpu_custom_call.1']
  %s0 = inlined_call_operand.hbm [shape: bf16[2,32,768], index: 0, kind: input, shape index: {}]
  %s1 = inlined_call_operand.vmem [shape: f32[2,32,1], index: 1, kind: input, shape index: {}]
  %s2 = inlined_call_operand.vmem [shape: f32[1,768], index: 2, kind: input, shape index: {}]
  %s3 = inlined_call_operand.<no memory space> [shape: f32[1,1], index: 3, kind: input, shape index: {}]
  %s4 = inlined_call_operand.vmem [shape: f32[1,128], index: 4, kind: input, shape index: {}]
  %s5 = inlined_call_operand.vmem [shape: f32[1,128], index: 5, kind: input, shape index: {}]
  %s6 = inlined_call_operand.hbm [shape: f32[2,1,128], index: 6, kind: output, shape index: {}]
  %s7 = sld [smem:[#allocation0]]
  $region69: #{tpu_custom_call.1} parent=0
    _
  %s9 = ssub.s32 1, %s7
  %s10 = scalar_select 0, %s9, %s7
  %v11 = vstv %s3
  %12 = vst [vmem:[#allocation5] sm:$0x1] %v11
  $region1: #{tpu_custom_call.1} parent=0
    #allocation6 [shape = 'u8[98304]{0}', space=vmem, size = 0x18000, scoped, tag = 'input window, operand 0']
    #allocation7 [shape = 's32[2]{0}', space=sflag, size = 0x8, scoped, tag = 'scoped memory for tpu_custom_call.1']
    #allocation8 [shape = 's32[2]{0}', space=sflag, size = 0x8, scoped, tag = 'scoped memory for tpu_custom_call.1']
    #allocation9 [shape = 'u8[1024]{0}', space=vmem, size = 0x400, scoped, tag = 'output window, operand 0']
    %13 = vsyncpa [#allocation7], 0
    %s14 = scalar_lea.sflag [#allocation7], 1
    %15 = vsyncpa %s14, 0
    %16 = vsyncpa [#allocation8], 0
    %s17 = scalar_lea.sflag [#allocation8], 1
    %18 = vsyncpa %s17, 0
    loop: start=0, step=1, limit=4
    $region2: #{tpu_custom_call.1} parent=1 // loop_pre_header
      _
    $region3: #{tpu_custom_call.1} parent=1 // loop_header
      %s20 = sphi 0, %s24
      %p21 = scmp.ge.s32.totalorder %s20, 4
      %s27 = sphi 0, %s39
      %s28 = sphi 0, %s35
      %s29 = sphi 0, %s27
      %s30 = sphi 0, %s28
      %s31 = sphi 0, %s29
      %s32 = sphi 0, %s30
      %s44 = sphi 0, %s46
      %s47 = sphi 0, %s44
      %s48 = sphi 0, %s47
      %s64 = sphi 0, %s48
      %s72 = sphi 0, %s74
      %s75 = sphi 0, %s72
      %s76 = sphi 0, %s75
      %s92 = sphi 0, %s76
      %s96 = sphi 0, %s96
      %s98 = sphi 0, %s96
      %s99 = sphi 0, %s98
      %s113 = sphi 0, %s99
      %s117 = sphi 0, %s117
      %s119 = sphi 0, %s117
      %s120 = sphi 0, %s119
      %s134 = sphi 0, %s120
      %s138 = sphi 0, %s138
      %s140 = sphi 0, %s138
      %s141 = sphi 0, %s140
      %s155 = sphi 0, %s141
      %s159 = sphi 0, %s159
      %s161 = sphi 0, %s159
      %s162 = sphi 0, %s161
      %s176 = sphi 0, %s162
      %s182 = sphi 0, %s184
      %s185 = sphi 0, %s182
      %s186 = sphi 0, %s185
      %s202 = sphi 0, %s186
    $region4: #{tpu_custom_call.1} parent=1 // loop_header_branch
      %23 = sbr.rel (%p21) target = $region8
    $region5: #{tpu_custom_call.1} parent=1 // loop_body
      %s25 = ssub.s32 %s20, 1
      %s26 = ssub.s32 %s20, 2
      %s33 = sadd.s32 1, %s28
      %p34 = scmp.ge.s32.totalorder %s33, 1
      %s35 = scalar_select %p34, 0, %s33
      %s36 = sadd.s32 1, %s27
      %s37 = scalar_select %p34, %s36, %s27
      %p38 = scmp.ge.s32.totalorder %s37, 2
      %s39 = scalar_select %p38, 0, %s37
      %s40 = ssub.s32 %s27, %s39
      %s41 = ssub.s32 %s28, %s35
      %s42 = sor.u32 %s40, %s41
      %p43 = scmp.eq.s32.totalorder %s42, 0
      %s45 = sadd.s32 %s44, 1
      %s46 = scalar_select %p43, %s44, %s45
      %p49 = pneg %p43
      %p50 = scmp.eq.s32.totalorder %s20, 1
      %p51 = por %p49, %p50
      %p52 = scmp.ne.s32.totalorder %s44, %s47
      %p53 = scmp.eq.s32.totalorder %s20, 0
      %p54 = por %p52, %p53
      %p55 = scmp.ne.s32.totalorder %s44, %s47
      %p56 = scmp.eq.s32.totalorder %s25, 1
      %p57 = por %p55, %p56
      %p58 = scmp.ne.s32.totalorder %s47, %s48
      %p59 = scmp.eq.s32.totalorder %s25, 0
      %p60 = por %p58, %p59
      %p61 = scmp.ne.s32.totalorder %s47, %s48
      %p62 = scmp.eq.s32.totalorder %s26, 1
      %p63 = por %p61, %p62
      %p65 = scmp.ne.s32.totalorder %s48, %s64
      %p66 = scmp.eq.s32.totalorder %s26, 0
      %p67 = por %p65, %p66
      %s68 = ssub.s32 %s27, %s39
      %s69 = ssub.s32 %s28, %s35
      %s70 = sor.u32 %s68, %s69
      %p71 = scmp.eq.s32.totalorder %s70, 0
      %s73 = sadd.s32 %s72, 1
      %s74 = scalar_select %p71, %s72, %s73
      %p77 = pneg %p71
      %p78 = scmp.eq.s32.totalorder %s20, 1
      %p79 = por %p77, %p78
      %p80 = scmp.ne.s32.totalorder %s72, %s75
      %p81 = scmp.eq.s32.totalorder %s20, 0
      %p82 = por %p80, %p81
      %p83 = scmp.ne.s32.totalorder %s72, %s75
      %p84 = scmp.eq.s32.totalorder %s25, 1
      %p85 = por %p83, %p84
      %p86 = scmp.ne.s32.totalorder %s75, %s76
      %p87 = scmp.eq.s32.totalorder %s25, 0
      %p88 = por %p86, %p87
      %p89 = scmp.ne.s32.totalorder %s75, %s76
      %p90 = scmp.eq.s32.totalorder %s26, 1
      %p91 = por %p89, %p90
      %p93 = scmp.ne.s32.totalorder %s76, %s92
      %p94 = scmp.eq.s32.totalorder %s26, 0
      %p95 = por %p93, %p94
      %s97 = sadd.s32 %s96, 1
      %p100 = scmp.eq.s32.totalorder %s20, 1
      %p101 = scmp.ne.s32.totalorder %s96, %s98
      %p102 = scmp.eq.s32.totalorder %s20, 0
      %p103 = por %p101, %p102
      %p104 = scmp.ne.s32.totalorder %s96, %s98
      %p105 = scmp.eq.s32.totalorder %s25, 1
      %p106 = por %p104, %p105
      %p107 = scmp.ne.s32.totalorder %s98, %s99
      %p108 = scmp.eq.s32.totalorder %s25, 0
      %p109 = por %p107, %p108
      %p110 = scmp.ne.s32.totalorder %s98, %s99
      %p111 = scmp.eq.s32.totalorder %s26, 1
      %p112 = por %p110, %p111
      %p114 = scmp.ne.s32.totalorder %s99, %s113
      %p115 = scmp.eq.s32.totalorder %s26, 0
      %p116 = por %p114, %p115
      %s118 = sadd.s32 %s117, 1
      %p121 = scmp.eq.s32.totalorder %s20, 1
      %p122 = scmp.ne.s32.totalorder %s117, %s119
      %p123 = scmp.eq.s32.totalorder %s20, 0
      %p124 = por %p122, %p123
      %p125 = scmp.ne.s32.totalorder %s117, %s119
      %p126 = scmp.eq.s32.totalorder %s25, 1
      %p127 = por %p125, %p126
      %p128 = scmp.ne.s32.totalorder %s119, %s120
      %p129 = scmp.eq.s32.totalorder %s25, 0
      %p130 = por %p128, %p129
      %p131 = scmp.ne.s32.totalorder %s119, %s120
      %p132 = scmp.eq.s32.totalorder %s26, 1
      %p133 = por %p131, %p132
      %p135 = scmp.ne.s32.totalorder %s120, %s134
      %p136 = scmp.eq.s32.totalorder %s26, 0
      %p137 = por %p135, %p136
      %s139 = sadd.s32 %s138, 1
      %p142 = scmp.eq.s32.totalorder %s20, 1
      %p143 = scmp.ne.s32.totalorder %s138, %s140
      %p144 = scmp.eq.s32.totalorder %s20, 0
      %p145 = por %p143, %p144
      %p146 = scmp.ne.s32.totalorder %s138, %s140
      %p147 = scmp.eq.s32.totalorder %s25, 1
      %p148 = por %p146, %p147
      %p149 = scmp.ne.s32.totalorder %s140, %s141
      %p150 = scmp.eq.s32.totalorder %s25, 0
      %p151 = por %p149, %p150
      %p152 = scmp.ne.s32.totalorder %s140, %s141
      %p153 = scmp.eq.s32.totalorder %s26, 1
      %p154 = por %p152, %p153
      %p156 = scmp.ne.s32.totalorder %s141, %s155
      %p157 = scmp.eq.s32.totalorder %s26, 0
      %p158 = por %p156, %p157
      %s160 = sadd.s32 %s159, 1
      %p163 = scmp.eq.s32.totalorder %s20, 1
      %p164 = scmp.ne.s32.totalorder %s159, %s161
      %p165 = scmp.eq.s32.totalorder %s20, 0
      %p166 = por %p164, %p165
      %p167 = scmp.ne.s32.totalorder %s159, %s161
      %p168 = scmp.eq.s32.totalorder %s25, 1
      %p169 = por %p167, %p168
      %p170 = scmp.ne.s32.totalorder %s161, %s162
      %p171 = scmp.eq.s32.totalorder %s25, 0
      %p172 = por %p170, %p171
      %p173 = scmp.ne.s32.totalorder %s161, %s162
      %p174 = scmp.eq.s32.totalorder %s26, 1
      %p175 = por %p173, %p174
      %p177 = scmp.ne.s32.totalorder %s162, %s176
      %p178 = scmp.eq.s32.totalorder %s26, 0
      %p179 = por %p177, %p178
      %s180 = ssub.s32 %s27, %s39
      %p181 = scmp.eq.s32.totalorder %s180, 0
      %s183 = sadd.s32 %s182, 1
      %s184 = scalar_select %p181, %s182, %s183
      %p187 = pneg %p181
      %p188 = scmp.eq.s32.totalorder %s20, 1
      %p189 = por %p187, %p188
      %p190 = scmp.ne.s32.totalorder %s182, %s185
      %p191 = scmp.eq.s32.totalorder %s20, 0
      %p192 = por %p190, %p191
      %p193 = scmp.ne.s32.totalorder %s182, %s185
      %p194 = scmp.eq.s32.totalorder %s25, 1
      %p195 = por %p193, %p194
      %p196 = scmp.ne.s32.totalorder %s185, %s186
      %p197 = scmp.eq.s32.totalorder %s25, 0
      %p198 = por %p196, %p197
      %p199 = scmp.ne.s32.totalorder %s185, %s186
      %p200 = scmp.eq.s32.totalorder %s26, 1
      %p201 = por %p199, %p200
      %p203 = scmp.ne.s32.totalorder %s186, %s202
      %p204 = scmp.eq.s32.totalorder %s26, 0
      %p205 = por %p203, %p204
      %p206 = scmp.le.s32.totalorder 1, %s20
      %p207 = scmp.lt.s32.totalorder %s20, 3
      %p208 = pnand %p206, %p207
      %p209 = pneg %p208
      // Predicated region
      $region9: #{tpu_custom_call.1} parent=5 // pred_check
        _
      $region10: #{tpu_custom_call.1} parent=5 // pred_check_branch
        %211 = sbr.rel (%p208) target = $region12
      $region11: #{tpu_custom_call.1} parent=5 // pred_region
        %s212 = ssub.s32 %s20, 1
        // Predicated region
        $region13: #{tpu_custom_call.1} parent=11 // pred_check
          %p213 = pneg %p109
        $region14: #{tpu_custom_call.1} parent=11 // pred_check_branch
          %215 = sbr.rel (%p213) target = $region16
        $region15: #{tpu_custom_call.1} parent=11 // pred_region
          _
        $region16: #{tpu_custom_call.1} parent=11 // pred_fallthru
          _
        // Predicated region
        $region17: #{tpu_custom_call.1} parent=11 // pred_check
          %p216 = pneg %p130
        $region18: #{tpu_custom_call.1} parent=11 // pred_check_branch
          %218 = sbr.rel (%p216) target = $region20
        $region19: #{tpu_custom_call.1} parent=11 // pred_region
          _
        $region20: #{tpu_custom_call.1} parent=11 // pred_fallthru
          _
        // Predicated region
        $region21: #{tpu_custom_call.1} parent=11 // pred_check
          %p219 = pneg %p151
        $region22: #{tpu_custom_call.1} parent=11 // pred_check_branch
          %221 = sbr.rel (%p219) target = $region24
        $region23: #{tpu_custom_call.1} parent=11 // pred_region
          _
        $region24: #{tpu_custom_call.1} parent=11 // pred_fallthru
          _
        // Predicated region
        $region25: #{tpu_custom_call.1} parent=11 // pred_check
          %p222 = pneg %p172
        $region26: #{tpu_custom_call.1} parent=11 // pred_check_branch
          %224 = sbr.rel (%p222) target = $region28
        $region27: #{tpu_custom_call.1} parent=11 // pred_region
          _
        $region28: #{tpu_custom_call.1} parent=11 // pred_fallthru
          _
      $region12: #{tpu_custom_call.1} parent=5 // pred_fallthru
        _
      %p225 = scmp.lt.s32.totalorder %s20, 2
      // Predicated region
      $region29: #{tpu_custom_call.1} parent=5 // pred_check
        %p226 = pneg %p225
      $region30: #{tpu_custom_call.1} parent=5 // pred_check_branch
        %228 = sbr.rel (%p226) target = $region32
      $region31: #{tpu_custom_call.1} parent=5 // pred_region
        // Predicated region
        $region33: #{tpu_custom_call.1} parent=31 // pred_check
          %p229 = pneg %p54
        $region34: #{tpu_custom_call.1} parent=31 // pred_check_branch
          %231 = sbr.rel (%p229) target = $region36
        $region35: #{tpu_custom_call.1} parent=31 // pred_region
          %s232 = sand.u32 %s44, 1
          %s233 = scalar_lea.sflag [#allocation7], %s232
          %s234 = sand.u32 %s44, 1
          %s235 = smul.addr %s234, 96
          %s236 = scalar_lea.vmem [#allocation6], %s235
          %s237 = smul.u32 4, %s28
          %s239 = ssub.s32 1536, 1536
          %240 = vsyncadd %s233, %s239
          %s241 = smul.addr %s237, 6
          %s242 = smul.addr %s27, 24
          %s243 = sadd.s32 %s241, %s242
          %s244 = smul.addr %s243, 64
          %s245 = scalar_lea.hbm %s0, %s244
          %s246 = sshll.u32 %s236, 4
          %s247 = int_to_ptr.vmem [resolvable:$true] %s246
          %252 = dma.hbm_to_vmem [thread:$0]  %s245, 1536, %s247, %s233, 384, 384, 24
        $region36: #{tpu_custom_call.1} parent=31 // pred_fallthru
          _
        // Predicated region
        $region37: #{tpu_custom_call.1} parent=31 // pred_check
          %p253 = pneg %p82
        $region38: #{tpu_custom_call.1} parent=31 // pred_check_branch
          %255 = sbr.rel (%p253) target = $region40
        $region39: #{tpu_custom_call.1} parent=31 // pred_region
          %s256 = smul.u32 4, %s28
          %p257 = scmp.lt.s32.totalorder %s27, 1
          %s258 = scalar_select %p257, %s27, 1
          %p259 = scmp.lt.s32.totalorder %s256, 3
          %s260 = scalar_select %p259, %s256, 3
          %s261 = smul.addr %s258, 4
          %s262 = sadd.s32 %s260, %s261
          %s263 = smul.addr %s262, 8
          %s264 = scalar_lea.vmem %s1, %s263
          %s265 = smul.u32 4, %s28
        $region40: #{tpu_custom_call.1} parent=31 // pred_fallthru
          _
      $region32: #{tpu_custom_call.1} parent=5 // pred_fallthru
        _
      %p266 = scmp.le.s32.totalorder 1, %s20
      %p267 = scmp.lt.s32.totalorder %s20, 3
      %p268 = pnand %p266, %p267
      %p269 = pneg %p268
      // Predicated region
      $region41: #{tpu_custom_call.1} parent=5 // pred_check
        _
      $region42: #{tpu_custom_call.1} parent=5 // pred_check_branch
        %271 = sbr.rel (%p268) target = $region44
      $region43: #{tpu_custom_call.1} parent=5 // pred_region
        %s272 = ssub.s32 %s20, 1
        %s273 = sand.u32 %s47, 1
        %s274 = scalar_lea.sflag [#allocation7], %s273
        %s275 = sand.u32 %s47, 1
        %s276 = smul.addr %s275, 96
        %s277 = scalar_lea.vmem [#allocation6], %s276
        // Predicated region
        $region45: #{tpu_custom_call.1} parent=43 // pred_check
          %p278 = pneg %p60
        $region46: #{tpu_custom_call.1} parent=43 // pred_check_branch
          %280 = sbr.rel (%p278) target = $region48
        $region47: #{tpu_custom_call.1} parent=43 // pred_region
          %281 = dma.done %s274, 1536
        $region48: #{tpu_custom_call.1} parent=43 // pred_fallthru
          _
        %s282 = sand.u32 %s47, 1
        %s283 = scalar_lea.sflag [#allocation7], %s282
        %s284 = sand.u32 %s47, 1
        %s285 = smul.addr %s284, 96
        %s286 = scalar_lea.vmem [#allocation6], %s285
        %p287 = pneg %p60
        %p288 = pneg %p57
        %s289 = smul.u32 4, %s30
        %p290 = scmp.lt.s32.totalorder %s29, 1
        %s291 = scalar_select %p290, %s29, 1
        %p292 = scmp.lt.s32.totalorder %s289, 3
        %s293 = scalar_select %p292, %s289, 3
        %s294 = smul.addr %s291, 4
        %s295 = sadd.s32 %s293, %s294
        %s296 = smul.addr %s295, 8
        %s297 = scalar_lea.vmem %s1, %s296
        %p298 = pneg %p88
        %p299 = pneg %p85
        %p300 = pneg %p109
        %p301 = pneg %p106
        %p302 = pneg %p130
        %p303 = pneg %p127
        %p304 = pneg %p151
        %p305 = pneg %p148
        %p306 = pneg %p172
        %p307 = pneg %p169
        %p308 = pneg %p198
        %p309 = pneg %p195
        %s310 = sand.u32 %s185, 1
        %s311 = scalar_lea.sflag [#allocation8], %s310
        %s312 = sand.u32 %s185, 1
        %s313 = scalar_lea.vmem [#allocation9], %s312
        %s314 = smul.u32 4, %s30
        %s315 = smul.u32 4, %s30
        %p316 = scmp.lt.s32.totalorder %s29, 1
        %s317 = scalar_select %p316, %s29, 1
        %p318 = scmp.lt.s32.totalorder %s315, 3
        %s319 = scalar_select %p318, %s315, 3
        %s320 = smul.addr %s317, 4
        %s321 = sadd.s32 %s319, %s320
        %s322 = smul.addr %s321, 8
        %s323 = scalar_lea.vmem %s1, %s322
        %s324 = smul.u32 4, %s30
        %p325 = scmp.eq.s32.totalorder %s30, 0
        // Predicated region
        $region49: #{tpu_custom_call.1} parent=43 // pred_check
          %p326 = pneg %p325
        $region50: #{tpu_custom_call.1} parent=43 // pred_check_branch
          %328 = sbr.rel (%p326) target = $region52
        $region51: #{tpu_custom_call.1} parent=43 // pred_region
          %vm329 = vcmask 0
          %330 = vst.msk [vmem:[#allocation2] sm:$0x1] %vm329, -inf
          %331 = vst.msk [vmem:[#allocation3] sm:$0x1] %vm329, 0.0
          %332 = vst [vmem:[#allocation4] sm:$0x1] 0.0
        $region52: #{tpu_custom_call.1} parent=43 // pred_fallthru
          _
        %v333 = vld [vmem:[%s277] sm:$0xff]
        %v334 = vld [vmem:[%s277 + $0x8] sm:$0xff]
        %v335 = vld [vmem:[%s277 + $0x10] sm:$0xff]
        %v336 = vld [vmem:[%s277 + $0x18] sm:$0xff]
        %v337 = vld [vmem:[%s277 + $0x20] sm:$0xff]
        %v338 = vld [vmem:[%s277 + $0x28] sm:$0xff]
        %v339 = vld [vmem:[%s277 + $0x30] sm:$0xff]
        %v340 = vld [vmem:[%s277 + $0x38] sm:$0xff]
        %v341 = vld [vmem:[%s277 + $0x40] sm:$0xff]
        %v342 = vld [vmem:[%s277 + $0x48] sm:$0xff]
        %v343 = vld [vmem:[%s277 + $0x50] sm:$0xff]
        %v344 = vld [vmem:[%s277 + $0x58] sm:$0xff]
        %v345 = vunpack.c.l.bf16 %v333
        %v346 = vunpack.c.h.bf16 %v333
        %v347 = vunpack.c.l.bf16 %v334
        %v348 = vunpack.c.h.bf16 %v334
        %v349 = vunpack.c.l.bf16 %v335
        %v350 = vunpack.c.h.bf16 %v335
        %v351 = vunpack.c.l.bf16 %v336
        %v352 = vunpack.c.h.bf16 %v336
        %v353 = vunpack.c.l.bf16 %v337
        %v354 = vunpack.c.h.bf16 %v337
        %v355 = vunpack.c.l.bf16 %v338
        %v356 = vunpack.c.h.bf16 %v338
        %v357 = vunpack.c.l.bf16 %v339
        %v358 = vunpack.c.h.bf16 %v339
        %v359 = vunpack.c.l.bf16 %v340
        %v360 = vunpack.c.h.bf16 %v340
        %v361 = vunpack.c.l.bf16 %v341
        %v362 = vunpack.c.h.bf16 %v341
        %v363 = vunpack.c.l.bf16 %v342
        %v364 = vunpack.c.h.bf16 %v342
        %v365 = vunpack.c.l.bf16 %v343
        %v366 = vunpack.c.h.bf16 %v343
        %v367 = vunpack.c.l.bf16 %v344
        %v368 = vunpack.c.h.bf16 %v344
        %v369 = vld [vmem:[%s323] sm:$0xff]
        %v370 = vld [vmem:[%s323 + $0x8] sm:$0xff]
        %v371 = vld [vmem:[%s323 + $0x10] sm:$0xff]
        %v372 = vld [vmem:[%s323 + $0x18] sm:$0xff]
        %v373 = vld [vmem:[%s2] sm:$0x3f]
        %v375 = vlaneseq
        %v376 = vshrl.u32 %v375, 7
        %v377 = vsub.s32 0, %v376
        %v378 = vrot.slane %v373, %v377
        %v379 = vlaneseq
        %v380 = vshrl.u32 %v379, 7
        %v381 = vsub.s32 1, %v380
        %v382 = vrot.slane %v373, %v381
        %v383 = vlaneseq
        %v384 = vshrl.u32 %v383, 7
        %v385 = vsub.s32 2, %v384
        %v386 = vrot.slane %v373, %v385
        %v387 = vlaneseq
        %v388 = vshrl.u32 %v387, 7
        %v389 = vsub.s32 3, %v388
        %v390 = vrot.slane %v373, %v389
        %v391 = vlaneseq
        %v392 = vshrl.u32 %v391, 7
        %v393 = vsub.s32 4, %v392
        %v394 = vrot.slane %v373, %v393
        %v395 = vlaneseq
        %v396 = vshrl.u32 %v395, 7
        %v397 = vsub.s32 5, %v396
        %v398 = vrot.slane %v373, %v397
        %v405 = vmul.f32 %v345, %v378
        %v406 = vmul.f32 %v346, %v382
        %v407 = vmul.f32 %v347, %v386
        %v408 = vmul.f32 %v348, %v390
        %v409 = vmul.f32 %v349, %v394
        %v410 = vmul.f32 %v350, %v398
        %v411 = vmul.f32 %v351, %v378
        %v412 = vmul.f32 %v352, %v382
        %v413 = vmul.f32 %v353, %v386
        %v414 = vmul.f32 %v354, %v390
        %v415 = vmul.f32 %v355, %v394
        %v416 = vmul.f32 %v356, %v398
        %v417 = vmul.f32 %v357, %v378
        %v418 = vmul.f32 %v358, %v382
        %v419 = vmul.f32 %v359, %v386
        %v420 = vmul.f32 %v360, %v390
        %v421 = vmul.f32 %v361, %v394
        %v422 = vmul.f32 %v362, %v398
        %v423 = vmul.f32 %v363, %v378
        %v424 = vmul.f32 %v364, %v382
        %v425 = vmul.f32 %v365, %v386
        %v426 = vmul.f32 %v366, %v390
        %v427 = vmul.f32 %v367, %v394
        %v428 = vmul.f32 %v368, %v398
        %v429 = vadd.f32 %v405, %v406
        %v430 = vadd.f32 %v429, %v407
        %v431 = vadd.f32 %v430, %v408
        %v432 = vadd.f32 %v431, %v409
        %v433 = vadd.f32 %v432, %v410
        %434 = vadd.xlane.f32.xlu0 %v433
        %v435 = vpop.xlane.xlu0 %434
        %v436 = vadd.f32 %v411, %v412
        %v437 = vadd.f32 %v436, %v413
        %v438 = vadd.f32 %v437, %v414
        %v439 = vadd.f32 %v438, %v415
        %v440 = vadd.f32 %v439, %v416
        %441 = vadd.xlane.f32.xlu0 %v440
        %v442 = vpop.xlane.xlu0 %441
        %v443 = vadd.f32 %v417, %v418
        %v444 = vadd.f32 %v443, %v419
        %v445 = vadd.f32 %v444, %v420
        %v446 = vadd.f32 %v445, %v421
        %v447 = vadd.f32 %v446, %v422
        %448 = vadd.xlane.f32.xlu0 %v447
        %v449 = vpop.xlane.xlu0 %448
        %v450 = vadd.f32 %v423, %v424
        %v451 = vadd.f32 %v450, %v425
        %v452 = vadd.f32 %v451, %v426
        %v453 = vadd.f32 %v452, %v427
        %v454 = vadd.f32 %v453, %v428
        %455 = vadd.xlane.f32.xlu0 %v454
        %v456 = vpop.xlane.xlu0 %455
        %v457 = vld [vmem:[#allocation5] sm:$0x1]
        %v459 = vlaneseq
        %v460 = vshrl.u32 %v459, 7
        %v461 = vsub.s32 0, %v460
        %v462 = vrot.slane %v457, %v461
        %v464 = vadd.f32 %v435, %v462
        %v465 = vadd.f32 %v442, %v462
        %v466 = vadd.f32 %v449, %v462
        %v467 = vadd.f32 %v456, %v462
        %v468 = vld [vmem:[#allocation2] sm:$0x1]
        %vm469 = vcmask 7168
        %v470 = vsel %vm469, %v464, -inf
        %v471 = vsel %vm469, %v465, -inf
        %v472 = vsel %vm469, %v466, -inf
        %v473 = vsel %vm469, %v467, -inf
        %v474 = vmax.f32 %v470, %v471
        %v475 = vmax.f32 %v472, %v473
        %v476 = vmax.f32 %v474, %v475
        %v477 = vrot.slane %v476, 4
        %v478 = vmax.f32 %v476, %v477
        %v479 = vrot.slane %v478, 2
        %v480 = vmax.f32 %v478, %v479
        %v481 = vrot.slane %v480, 1
        %v482 = vmax.f32 %v480, %v481
        %v483 = vmax.f32 %v468, %v482
        %v484 = vsub.f32 %v468, %v483
        %v485 = vmul.f32 %v484, 1.442695
        %v486 = vpow.pop %v485
        %v488 = vlaneseq
        %v489 = vshrl.u32 %v488, 7
        %v490 = vsub.s32 0, %v489
        %v491 = vrot.slane %v483, %v490
        %v493 = vsub.f32 %v464, %v491
        %v494 = vsub.f32 %v465, %v491
        %v495 = vsub.f32 %v466, %v491
        %v496 = vsub.f32 %v467, %v491
        %v497 = vmul.f32 %v493, 1.442695
        %v498 = vpow.pop %v497
        %v499 = vmul.f32 %v494, 1.442695
        %v500 = vpow.pop %v499
        %v501 = vmul.f32 %v495, 1.442695
        %v502 = vpow.pop %v501
        %v503 = vmul.f32 %v496, 1.442695
        %v504 = vpow.pop %v503
        %v505 = vld [vmem:[%s4] sm:$0x1]
        %507 = vset.pattern.permute.xlu0 0
        %508 = vperm.xlu0 %507, %v369
        %v509 = vpop.permute.xlu0 %508
        %512 = vset.pattern.permute.xlu0 0
        %513 = vperm.xlu0 %512, %v370
        %v514 = vpop.permute.xlu0 %513
        %517 = vset.pattern.permute.xlu0 0
        %518 = vperm.xlu0 %517, %v371
        %v519 = vpop.permute.xlu0 %518
        %522 = vset.pattern.permute.xlu0 0
        %523 = vperm.xlu0 %522, %v372
        %v524 = vpop.permute.xlu0 %523
        %v527 = vlaneseq
        %v528 = vshrl.u32 %v527, 7
        %v529 = vsub.s32 0, %v528
        %v530 = vrot.slane %v505, %v529
        %v532 = vmul.f32 %v509, %v530
        %v533 = vmul.f32 %v514, %v530
        %v534 = vmul.f32 %v519, %v530
        %v535 = vmul.f32 %v524, %v530
        %v536 = vld [vmem:[%s5] sm:$0x1]
        %v538 = vlaneseq
        %v539 = vshrl.u32 %v538, 7
        %v540 = vsub.s32 0, %v539
        %v541 = vrot.slane %v536, %v540
        %v543 = vadd.f32 %v532, %v541
        %v544 = vadd.f32 %v533, %v541
        %v545 = vadd.f32 %v534, %v541
        %v546 = vadd.f32 %v535, %v541
        %v547 = vxor.u32 %v543, 2147483648
        %v548 = vxor.u32 %v544, 2147483648
        %v549 = vxor.u32 %v545, 2147483648
        %v550 = vxor.u32 %v546, 2147483648
        %v551 = vmul.f32 %v547, 1.442695
        %v552 = vpow.pop %v551
        %v553 = vmul.f32 %v548, 1.442695
        %v554 = vpow.pop %v553
        %v555 = vmul.f32 %v549, 1.442695
        %v556 = vpow.pop %v555
        %v557 = vmul.f32 %v550, 1.442695
        %v558 = vpow.pop %v557
        %v559 = vadd.f32 %v552, 1.0
        %v560 = vadd.f32 %v554, 1.0
        %v561 = vadd.f32 %v556, 1.0
        %v562 = vadd.f32 %v558, 1.0
        %v563 = vrcp.pop %v559
        %v564 = vmul.f32 1.0, %v563
        %v565 = vrcp.pop %v560
        %v566 = vmul.f32 1.0, %v565
        %v567 = vrcp.pop %v561
        %v568 = vmul.f32 1.0, %v567
        %v569 = vrcp.pop %v562
        %v570 = vmul.f32 1.0, %v569
        %v571 = vmul.f32 %v543, %v564
        %v572 = vmul.f32 %v544, %v566
        %v573 = vmul.f32 %v545, %v568
        %v574 = vmul.f32 %v546, %v570
        %v575 = vld [vmem:[#allocation3] sm:$0x1]
        %v576 = vmul.f32 %v575, %v486
        %v577 = vsel %vm469, %v498, 0.0
        %v578 = vsel %vm469, %v500, 0.0
        %v579 = vadd.f32 %v577, %v578
        %v580 = vsel %vm469, %v502, 0.0
        %v581 = vadd.f32 %v579, %v580
        %v582 = vsel %vm469, %v504, 0.0
        %v583 = vadd.f32 %v581, %v582
        %v584 = vrot.slane %v583, 4
        %v585 = vadd.f32 %v583, %v584
        %v586 = vrot.slane %v585, 2
        %v587 = vadd.f32 %v585, %v586
        %v588 = vrot.slane %v587, 1
        %v589 = vadd.f32 %v587, %v588
        %v590 = vadd.f32 %v576, %v589
        %vm591 = vcmask 0
        %592 = vst.msk [vmem:[#allocation3] sm:$0x1] %vm591, %v590
        %v593 = vld [vmem:[#allocation4] sm:$0x1]
        %595 = vset.pattern.permute.xlu0 0
        %596 = vperm.xlu0 %595, %v486
        %v597 = vpop.permute.xlu0 %596
        %v599 = vlaneseq
        %v600 = vshrl.u32 %v599, 7
        %v601 = vsub.s32 0, %v600
        %v602 = vrot.slane %v597, %v601
        %v603 = vmul.f32 %v593, %v602
        %605 = vset.pattern.permute.xlu0 0
        %606 = vperm.xlu0 %605, %v498
        %v607 = vpop.permute.xlu0 %606
        %610 = vset.pattern.permute.xlu0 0
        %611 = vperm.xlu0 %610, %v500
        %v612 = vpop.permute.xlu0 %611
        %615 = vset.pattern.permute.xlu0 0
        %616 = vperm.xlu0 %615, %v502
        %v617 = vpop.permute.xlu0 %616
        %620 = vset.pattern.permute.xlu0 0
        %621 = vperm.xlu0 %620, %v504
        %v622 = vpop.permute.xlu0 %621
        %v624 = vmul.f32 %v607, %v571
        %v625 = vmul.f32 %v612, %v572
        %v626 = vmul.f32 %v617, %v573
        %v627 = vmul.f32 %v622, %v574
        %v628 = vadd.f32 %v624, %v625
        %v629 = vadd.f32 %v628, %v626
        %v630 = vadd.f32 %v629, %v627
        %v631 = vrot.slane %v630, 4
        %v632 = vadd.f32 %v630, %v631
        %v633 = vrot.slane %v632, 2
        %v634 = vadd.f32 %v632, %v633
        %v635 = vrot.slane %v634, 1
        %v636 = vadd.f32 %v634, %v635
        %v637 = vadd.f32 %v603, %v636
        %638 = vst [vmem:[#allocation4] sm:$0x1] %v637
        %639 = vst.msk [vmem:[#allocation2] sm:$0x1] %vm591, %v483
        // Predicated region
        $region53: #{tpu_custom_call.1} parent=43 // pred_check
          %p640 = pneg %p325
        $region54: #{tpu_custom_call.1} parent=43 // pred_check_branch
          %642 = sbr.rel (%p640) target = $region56
        $region55: #{tpu_custom_call.1} parent=43 // pred_region
          %v643 = vld [vmem:[#allocation4] sm:$0x1]
          %v644 = vld [vmem:[#allocation3] sm:$0x1]
          %646 = vset.pattern.permute.xlu0 0
          %647 = vperm.xlu0 %646, %v644
          %v648 = vpop.permute.xlu0 %647
          %v650 = vlaneseq
          %v651 = vshrl.u32 %v650, 7
          %v652 = vsub.s32 0, %v651
          %v653 = vrot.slane %v648, %v652
          %v654 = vrcp.pop %v653
          %v655 = vmul.f32 %v643, %v654
          %656 = vst [vmem:[%s313] sm:$0x1] %v655
        $region56: #{tpu_custom_call.1} parent=43 // pred_fallthru
          _
        %s657 = sand.u32 %s185, 1
        %s658 = scalar_lea.sflag [#allocation8], %s657
        %s659 = sand.u32 %s185, 1
        %s660 = scalar_lea.vmem [#allocation9], %s659
        // Predicated region
        $region57: #{tpu_custom_call.1} parent=43 // pred_check
          %p661 = pneg %p195
        $region58: #{tpu_custom_call.1} parent=43 // pred_check_branch
          %663 = sbr.rel (%p661) target = $region60
        $region59: #{tpu_custom_call.1} parent=43 // pred_region
          %s665 = ssub.s32 16, 16
          %666 = vsyncadd %s658, %s665
          %s667 = smul.addr %s29, 16
          %s668 = scalar_lea.hbm %s6, %s667
          %s670 = sshll.u32 %s660, 4
          %s671 = int_to_ptr.vmem [resolvable:$true] %s670
          %673 = dma.vmem_to_hbm [thread:$0]  %s671, 16, %s668, %s658
        $region60: #{tpu_custom_call.1} parent=43 // pred_fallthru
          _
      $region44: #{tpu_custom_call.1} parent=5 // pred_fallthru
        _
      %p674 = scmp.le.s32.totalorder 2, %s20
      // Predicated region
      $region61: #{tpu_custom_call.1} parent=5 // pred_check
        %p675 = pneg %p674
      $region62: #{tpu_custom_call.1} parent=5 // pred_check_branch
        %677 = sbr.rel (%p675) target = $region64
      $region63: #{tpu_custom_call.1} parent=5 // pred_region
        %s678 = ssub.s32 %s20, 2
        // Predicated region
        $region65: #{tpu_custom_call.1} parent=63 // pred_check
          %p679 = pneg %p201
        $region66: #{tpu_custom_call.1} parent=63 // pred_check_branch
          %681 = sbr.rel (%p679) target = $region68
        $region67: #{tpu_custom_call.1} parent=63 // pred_region
          %s682 = sand.u32 %s186, 1
          %s683 = scalar_lea.sflag [#allocation8], %s682
          %s684 = sand.u32 %s186, 1
          %s685 = scalar_lea.vmem [#allocation9], %s684
          %686 = dma.done %s683, 16
        $region68: #{tpu_custom_call.1} parent=63 // pred_fallthru
          _
      $region64: #{tpu_custom_call.1} parent=5 // pred_fallthru
        _
    $region6: #{tpu_custom_call.1} parent=1 // loop_footer
      %s24 = sadd.s32 1, %s20
    $region7: #{tpu_custom_call.1} parent=1 // loop_footer_branch
      %19 = sbr.rel target = $region3
    $region8: #{tpu_custom_call.1} parent=1 // loop_exit
      _
    %687 = vsyncpa [#allocation7], 1
    %s688 = scalar_lea.sflag [#allocation7], 1
    %689 = vsyncpa %s688, 1
    %690 = vsyncpa [#allocation8], 1
    %s691 = scalar_lea.sflag [#allocation8], 1
    %692 = vsyncpa %s691, 1

</llo_original>
